<compile_context>
chip_gen: v5e
topology: v5e:2x2
jax: 0.10.0
libtpu: 0.0.40
codegen_flags: <defaults>
</compile_context>

<pallas_src>
import numpy as np
import jax
import jax.numpy as jnp
from jax.experimental import pallas as pl
from jax.experimental.pallas import tpu as pltpu


# Lane-block size for large batches (multiple of 128; tiny VMEM footprint).
_MAX_TB = 2048


def _fused_kernel(x_ref, w_ref, b_ref, o_ref):
    # x_ref: (KIN, TB)  flattened input pixels on sublanes, batch on lanes
    # w_ref: (N, KIN)   fully fused (conv+permute+linear) weight, transposed
    # b_ref: (N, 1)     fully fused bias
    # o_ref: (N, TB)    output features on sublanes, batch on lanes
    KIN, TB = x_ref.shape
    N = w_ref.shape[0]
    x = x_ref[...].astype(jnp.float32)
    w = w_ref[...].astype(jnp.float32)
    acc = jnp.broadcast_to(b_ref[...].astype(jnp.float32), (N, TB))
    # KIN == 4: unrolled VPU broadcast multiply-adds; operands are far below one
    # MXU tile, so jnp.dot (vmatmul push / result-FIFO pop) is deliberately avoided.
    for i in range(KIN):
        # w[:, i:i+1] -> (N, 1) lane broadcast; x[i:i+1, :] -> (1, TB) sublane splat.
        acc = acc + w[:, i:i + 1] * x[i:i + 1, :]
    o_ref[...] = acc.astype(o_ref.dtype)


def _fold_weights_np(conv_w, conv_b, lin_w, lin_b, in_shape, stride, padding):
    """Host-side (numpy) fold of im2col + conv + permute + linear.

    Returns:
      w_t : (N, KIN) float32   with N = OH*OW*F, KIN = Cin*H*W
      b   : (N, 1)   float32
      OH, OW, F
    """
    conv_w = np.asarray(conv_w, dtype=np.float32)
    conv_b = np.asarray(conv_b, dtype=np.float32)
    lin_w = np.asarray(lin_w, dtype=np.float32)
    lin_b = np.asarray(lin_b, dtype=np.float32)

    Cin, H, W = in_shape
    Cout, _, KH, KW = conv_w.shape
    F = lin_w.shape[0]
    sh, sw = stride
    ph, pw = padding
    OH = (H + 2 * ph - KH) // sh + 1
    OW = (W + 2 * pw - KW) // sw + 1
    K = Cin * KH * KW

    # conv weight (K, Cout) fused with linear weight (Cout, F) -> (K, F); biases folded.
    w_fused = conv_w.reshape(Cout, K).T @ lin_w.T          # (K, F)
    b_fused = conv_b @ lin_w.T + lin_b                     # (F,)

    # Static 0/1 im2col selection tensor:
    # S[c*H*W + ih*W + iw, oh*OW + ow, c*KH*KW + kh*KW + kw] = 1 iff input pixel
    # (c, ih, iw) is the (kh, kw) element of the patch feeding output (oh, ow).
    # Zero padding is handled by simply omitting out-of-range pixels.
    S = np.zeros((Cin * H * W, OH * OW, K), dtype=np.float32)
    for c in range(Cin):
        for oh in range(OH):
            for ow in range(OW):
                for kh in range(KH):
                    for kw in range(KW):
                        ih = sh * oh + kh - ph
                        iw = sw * ow + kw - pw
                        if 0 <= ih < H and 0 <= iw < W:
                            S[c * H * W + ih * W + iw,
                              oh * OW + ow,
                              c * KH * KW + kh * KW + kw] = 1.0

    w_total = np.einsum("ipk,kf->ipf", S, w_fused).reshape(Cin * H * W, OH * OW * F)
    b_total = np.tile(b_fused, OH * OW).reshape(OH * OW * F, 1)
    return np.ascontiguousarray(w_total.T), b_total, OH, OW, F


class FusedConvPermuteLinear:
    """conv(NCHW, stride, padding) -> permute(0,2,3,1) -> linear, as one Pallas MAC kernel."""

    def __init__(self, conv_w, conv_b, lin_w, lin_b, in_shape,
                 stride=(2, 2), padding=(1, 1)):
        w_t, b, OH, OW, F = _fold_weights_np(
            conv_w, conv_b, lin_w, lin_b, in_shape, stride, padding)
        # Folded once; uploaded once. Nothing here runs per forward call.
        self.w_t = jnp.asarray(w_t)      # (N, KIN)
        self.b = jnp.asarray(b)          # (N, 1)
        self.in_shape = in_shape
        self.OH, self.OW, self.F = OH, OW, F
        self._forward = jax.jit(self._forward_impl)

    def __call__(self, x):
        return self._forward(x)

    def _forward_impl(self, x):
        B = x.shape[0]
        Cin, H, W = self.in_shape
        KIN = Cin * H * W
        N = self.OH * self.OW * self.F

        # Lane-dense problem layout: batch on the last (lane) axis.
        x_t = x.reshape(B, KIN).T                          # (KIN, B)

        if B > _MAX_TB:
            tb = _MAX_TB                                   # multiple of 128
            grid = (pl.cdiv(B, tb),)                       # ragged tail is masked by Pallas
        else:
            tb = B                                         # full-extent lane block
            grid = (1,)

        out_t = pl.pallas_call(
            _fused_kernel,
            out_shape=jax.ShapeDtypeStruct((N, B), x.dtype),
            grid=grid,
            in_specs=[
                pl.BlockSpec((KIN, tb), lambda i: (0, i)),   # streamed batch tile
                pl.BlockSpec((N, KIN), lambda i: (0, 0)),    # resident fused weight
                pl.BlockSpec((N, 1), lambda i: (0, 0)),      # resident fused bias
            ],
            out_specs=pl.BlockSpec((N, tb), lambda i: (0, i)),
            compiler_params=pltpu.CompilerParams(
                dimension_semantics=("parallel",)),
        )(x_t, self.w_t, self.b)

        return out_t.T.reshape(B, self.OH, self.OW, self.F)


def _reference(x, conv_w, conv_b, lin_w, lin_b):
    """Pure-JAX reference: conv (NCHW) -> permute -> linear."""
    t1 = jax.lax.conv_general_dilated(
        x, conv_w, window_strides=(2, 2), padding=((1, 1), (1, 1)),
        dimension_numbers=("NCHW", "OIHW", "NCHW"))
    t1 = t1 + conv_b.reshape(1, -1, 1, 1)
    t3 = jnp.transpose(t1, (0, 2, 3, 1))
    return jnp.einsum("bhwc,fc->bhwf", t3, lin_w) + lin_b


if __name__ == "__main__":
    key = jax.random.PRNGKey(0)
    k_x, k_cw, k_cb, k_lw, k_lb = jax.random.split(key, 5)

    B, Cin, H, W = 3, 1, 2, 2
    Cout = 2            # TODO(synk): original module uses 1 (shape-inconsistent with Linear(2,2))
    KH = KW = 2
    F_in, F_out = 2, 2

    x1 = jax.random.normal(k_x, (B, Cin, H, W), dtype=jnp.float32)

    # Deterministic PyTorch-style uniform init
    k_conv = 1.0 / (Cin * KH * KW)
    conv_w = jax.random.uniform(k_cw, (Cout, Cin, KH, KW), jnp.float32,
                                -jnp.sqrt(k_conv), jnp.sqrt(k_conv))
    conv_b = jax.random.uniform(k_cb, (Cout,), jnp.float32,
                                -jnp.sqrt(k_conv), jnp.sqrt(k_conv))
    k_lin = 1.0 / F_in
    lin_w = jax.random.uniform(k_lw, (F_out, F_in), jnp.float32,
                               -jnp.sqrt(k_lin), jnp.sqrt(k_lin))
    lin_b = jax.random.uniform(k_lb, (F_out,), jnp.float32,
                               -jnp.sqrt(k_lin), jnp.sqrt(k_lin))

    model = FusedConvPermuteLinear(conv_w, conv_b, lin_w, lin_b, (Cin, H, W),
                                   stride=(2, 2), padding=(1, 1))
    out = model(x1)
    out = jax.block_until_ready(out)

    ref = _reference(x1, conv_w, conv_b, lin_w, lin_b)
    assert out.shape == (3, 2, 2, 2), out.shape
    assert jnp.allclose(out, ref, atol=1e-5, rtol=1e-5), "mismatch vs reference"

    print("KERNEL_OK")
</pallas_src>

<mosaic_0001>
module attributes {stable_mosaic.version = 11 : i64} {
  func.func @_fused_kernel(%arg0: i32, %arg1: memref<4x3xf32, #tpu.memory_space<vmem>>, %arg2: memref<8x4xf32, #tpu.memory_space<vmem>>, %arg3: memref<8x1xf32, #tpu.memory_space<vmem>>, %arg4: memref<8x3xf32, #tpu.memory_space<vmem>>) attributes {dimension_semantics = [#tpu.dimension_semantics<parallel>], iteration_bounds = array<i64: 1>, scalar_prefetch = 0 : i64, scratch_operands = 0 : i64, tpu.core_type = #tpu.core_type<tc>, window_params = [{transform_indices = @transform_0, window_bounds = array<i64: 4, 3>}, {pipeline_mode = #tpu.pipeline_mode<synchronous>, transform_indices = @transform_1, window_bounds = array<i64: 8, 4>}, {pipeline_mode = #tpu.pipeline_mode<synchronous>, transform_indices = @transform_2, window_bounds = array<i64: 8, 1>}, {transform_indices = @transform_3, window_bounds = array<i64: 8, 3>}]} {
    %c0 = arith.constant 0 : index
    %c0_0 = arith.constant 0 : index
    %0 = vector.load %arg1[%c0, %c0_0] : memref<4x3xf32, #tpu.memory_space<vmem>>, vector<4x3xf32>
    %c0_1 = arith.constant 0 : index
    %c0_2 = arith.constant 0 : index
    %1 = vector.load %arg2[%c0_1, %c0_2] : memref<8x4xf32, #tpu.memory_space<vmem>>, vector<8x4xf32>
    %c0_3 = arith.constant 0 : index
    %c0_4 = arith.constant 0 : index
    %2 = vector.load %arg3[%c0_3, %c0_4] : memref<8x1xf32, #tpu.memory_space<vmem>>, vector<8x1xf32>
    %3 = vector.shape_cast %2 : vector<8x1xf32> to vector<8x1xf32>
    %4 = vector.broadcast %3 : vector<8x1xf32> to vector<8x3xf32>
    %5 = vector.extract_strided_slice %1 {offsets = [0, 0], sizes = [8, 1], strides = [1, 1]} : vector<8x4xf32> to vector<8x1xf32>
    %6 = vector.extract_strided_slice %0 {offsets = [0, 0], sizes = [1, 3], strides = [1, 1]} : vector<4x3xf32> to vector<1x3xf32>
    %7 = vector.broadcast %5 : vector<8x1xf32> to vector<8x3xf32>
    %8 = vector.broadcast %6 : vector<1x3xf32> to vector<8x3xf32>
    %9 = arith.mulf %7, %8 : vector<8x3xf32>
    %10 = arith.addf %4, %9 : vector<8x3xf32>
    %11 = vector.extract_strided_slice %1 {offsets = [0, 1], sizes = [8, 1], strides = [1, 1]} : vector<8x4xf32> to vector<8x1xf32>
    %12 = vector.extract_strided_slice %0 {offsets = [1, 0], sizes = [1, 3], strides = [1, 1]} : vector<4x3xf32> to vector<1x3xf32>
    %13 = vector.broadcast %11 : vector<8x1xf32> to vector<8x3xf32>
    %14 = vector.broadcast %12 : vector<1x3xf32> to vector<8x3xf32>
    %15 = arith.mulf %13, %14 : vector<8x3xf32>
    %16 = arith.addf %10, %15 : vector<8x3xf32>
    %17 = vector.extract_strided_slice %1 {offsets = [0, 2], sizes = [8, 1], strides = [1, 1]} : vector<8x4xf32> to vector<8x1xf32>
    %18 = vector.extract_strided_slice %0 {offsets = [2, 0], sizes = [1, 3], strides = [1, 1]} : vector<4x3xf32> to vector<1x3xf32>
    %19 = vector.broadcast %17 : vector<8x1xf32> to vector<8x3xf32>
    %20 = vector.broadcast %18 : vector<1x3xf32> to vector<8x3xf32>
    %21 = arith.mulf %19, %20 : vector<8x3xf32>
    %22 = arith.addf %16, %21 : vector<8x3xf32>
    %23 = vector.extract_strided_slice %1 {offsets = [0, 3], sizes = [8, 1], strides = [1, 1]} : vector<8x4xf32> to vector<8x1xf32>
    %24 = vector.extract_strided_slice %0 {offsets = [3, 0], sizes = [1, 3], strides = [1, 1]} : vector<4x3xf32> to vector<1x3xf32>
    %25 = vector.broadcast %23 : vector<8x1xf32> to vector<8x3xf32>
    %26 = vector.broadcast %24 : vector<1x3xf32> to vector<8x3xf32>
    %27 = arith.mulf %25, %26 : vector<8x3xf32>
    %28 = arith.addf %22, %27 : vector<8x3xf32>
    %c0_5 = arith.constant 0 : index
    %c0_6 = arith.constant 0 : index
    %29 = vector.load %arg4[%c0_5, %c0_6] : memref<8x3xf32, #tpu.memory_space<vmem>>, vector<8x3xf32>
    tpu.vector_store %arg4[%c0_5, %c0_6], %28 {strides = array<i32>} : memref<8x3xf32, #tpu.memory_space<vmem>>, vector<8x3xf32>,
    return
  }
  func.func @transform_0(%arg0: i32) -> (i32, i32) {
    %c0_i32 = arith.constant 0 : i32
    %c0_i32_0 = arith.constant 0 : i32
    return %c0_i32, %arg0 : i32, i32
  }
  func.func @transform_1(%arg0: i32) -> (i32, i32) {
    %c0_i32 = arith.constant 0 : i32
    %c0_i32_0 = arith.constant 0 : i32
    %c0_i32_1 = arith.constant 0 : i32
    return %c0_i32, %c0_i32_0 : i32, i32
  }
  func.func @transform_2(%arg0: i32) -> (i32, i32) {
    %c0_i32 = arith.constant 0 : i32
    %c0_i32_0 = arith.constant 0 : i32
    %c0_i32_1 = arith.constant 0 : i32
    return %c0_i32, %c0_i32_0 : i32, i32
  }
  func.func @transform_3(%arg0: i32) -> (i32, i32) {
    %c0_i32 = arith.constant 0 : i32
    %c0_i32_0 = arith.constant 0 : i32
    return %c0_i32, %arg0 : i32, i32
  }
}

</mosaic_0001>

<llo_original>
// kernel: _forward_impl.1
$region0: #{_forward_impl.1}
  #allocation0 [shape = 'u32[]', space=smem, size = 0x4, offset = 0x4, fixed_abs, tag = 'smem constant byte address 0x4 - core index']
  #allocation1 [shape = 'u32[72,128]{1,0:T(1,128)}', space=vmem, size = 0x9000, scoped, tag = 'internal scratch']
  %s0 = inlined_call_operand.hbm [shape: f32[4,3], index: 0, kind: input, shape index: {}]
  %s1 = inlined_call_operand.hbm [shape: f32[8,4], index: 1, kind: input, shape index: {}]
  %s2 = inlined_call_operand.hbm [shape: f32[8,1], index: 2, kind: input, shape index: {}]
  %s3 = inlined_call_operand.hbm [shape: f32[8,3], index: 3, kind: output, shape index: {}]
  %s4 = sld [smem:[#allocation0]]
  $region34: #{_forward_impl.1} parent=0
    _
  %s6 = ssub.s32 1, %s4
  %s7 = scalar_select 0, %s6, %s4
  $region1: #{_forward_impl.1} parent=0
    #allocation2 [shape = 'u8[2048]{0}', space=vmem, size = 0x800, scoped, tag = 'input window, operand 0, single buffered']
    #allocation3 [shape = 's32[1]{0}', space=sflag, size = 0x4, scoped, tag = 'scoped memory for _forward_impl.1']
    #allocation4 [shape = 's32[1]{0}', space=sflag, size = 0x4, scoped, tag = 'scoped memory for _forward_impl.1']
    #allocation5 [shape = 'u8[4096]{0}', space=vmem, size = 0x1000, scoped, tag = 'input window, operand 1, single buffered']
    #allocation6 [shape = 's32[1]{0}', space=sflag, size = 0x4, scoped, tag = 'scoped memory for _forward_impl.1']
    #allocation7 [shape = 'u8[4096]{0}', space=vmem, size = 0x1000, scoped, tag = 'input window, operand 2, single buffered']
    #allocation8 [shape = 'u8[4096]{0}', space=vmem, size = 0x1000, scoped, tag = 'output window, operand 0, single buffered']
    %8 = vsyncpa [#allocation3], 0
    %9 = vsyncpa [#allocation6], 0
    %10 = vsyncpa [#allocation4], 0
    // Predicated region
    $region2: #{_forward_impl.1} parent=1 // pred_check
      _
    $region3: #{_forward_impl.1} parent=1 // pred_check_branch
      %12 = sbr.rel (0) target = $region5
    $region4: #{_forward_impl.1} parent=1 // pred_region
      %14 = vsyncadd [#allocation3], 0
      %s16 = sshll.u32 %s0, 4
      %s17 = int_to_ptr.hbm [resolvable:$true] %s16
      %s18 = sshll.u32 [#allocation2], 4
      %s19 = int_to_ptr.vmem [resolvable:$true] %s18
      %21 = dma.hbm_to_vmem [thread:$0]  %s17, 64, %s19, [#allocation3]
    $region5: #{_forward_impl.1} parent=1 // pred_fallthru
      _
    // Predicated region
    $region6: #{_forward_impl.1} parent=1 // pred_check
      _
    $region7: #{_forward_impl.1} parent=1 // pred_check_branch
      %23 = sbr.rel (0) target = $region9
    $region8: #{_forward_impl.1} parent=1 // pred_region
      %25 = vsyncadd [#allocation6], 0
      %s27 = sshll.u32 %s1, 4
      %s28 = int_to_ptr.hbm [resolvable:$true] %s27
      %s29 = sshll.u32 [#allocation5], 4
      %s30 = int_to_ptr.vmem [resolvable:$true] %s29
      %32 = dma.hbm_to_vmem [thread:$0]  %s28, 128, %s30, [#allocation6]
    $region9: #{_forward_impl.1} parent=1 // pred_fallthru
      _
    // Predicated region
    $region10: #{_forward_impl.1} parent=1 // pred_check
      _
    $region11: #{_forward_impl.1} parent=1 // pred_check_branch
      %34 = sbr.rel (0) target = $region13
    $region12: #{_forward_impl.1} parent=1 // pred_region
      %36 = vsyncadd [#allocation6], 0
      %s38 = sshll.u32 %s2, 4
      %s39 = int_to_ptr.hbm [resolvable:$true] %s38
      %s40 = sshll.u32 [#allocation7], 4
      %s41 = int_to_ptr.vmem [resolvable:$true] %s40
      %43 = dma.hbm_to_vmem [thread:$0]  %s39, 128, %s41, [#allocation6]
    $region13: #{_forward_impl.1} parent=1 // pred_fallthru
      _
    // Predicated region
    $region14: #{_forward_impl.1} parent=1 // pred_check
      _
    $region15: #{_forward_impl.1} parent=1 // pred_check_branch
      %45 = sbr.rel (0) target = $region17
    $region16: #{_forward_impl.1} parent=1 // pred_region
      %47 = dma.done [#allocation3], 64
    $region17: #{_forward_impl.1} parent=1 // pred_fallthru
      _
    // Predicated region
    $region18: #{_forward_impl.1} parent=1 // pred_check
      _
    $region19: #{_forward_impl.1} parent=1 // pred_check_branch
      %49 = sbr.rel (0) target = $region21
    $region20: #{_forward_impl.1} parent=1 // pred_region
      %51 = dma.done [#allocation6], 128
    $region21: #{_forward_impl.1} parent=1 // pred_fallthru
      _
    // Predicated region
    $region22: #{_forward_impl.1} parent=1 // pred_check
      _
    $region23: #{_forward_impl.1} parent=1 // pred_check_branch
      %53 = sbr.rel (0) target = $region25
    $region24: #{_forward_impl.1} parent=1 // pred_region
      %55 = dma.done [#allocation6], 128
    $region25: #{_forward_impl.1} parent=1 // pred_fallthru
      _
    %v56 = vld [vmem:[#allocation2] sm:$0xf]
    %v57 = vld [vmem:[#allocation5] sm:$0xff]
    %v58 = vld [vmem:[#allocation7] sm:$0xff]
    %60 = vset.pattern.permute.xlu0 0
    %61 = vperm.xlu0 %60, %v58
    %v62 = vpop.permute.xlu0 %61
    %65 = vset.pattern.permute.xlu0 0
    %66 = vperm.xlu0 %65, %v57
    %v67 = vpop.permute.xlu0 %66
    %v69 = vperm.slane %v56, 0
    %v70 = vmul.f32 %v67, %v69
    %v71 = vadd.f32 %v62, %v70
    %72 = vset.pattern.permute.xlu0 1
    %73 = vperm.xlu0 %72, %v57
    %v74 = vpop.permute.xlu0 %73
    %v76 = vperm.slane %v56, 1
    %v77 = vmul.f32 %v74, %v76
    %v78 = vadd.f32 %v71, %v77
    %79 = vset.pattern.permute.xlu0 2
    %80 = vperm.xlu0 %79, %v57
    %v81 = vpop.permute.xlu0 %80
    %v83 = vperm.slane %v56, 2
    %v84 = vmul.f32 %v81, %v83
    %v85 = vadd.f32 %v78, %v84
    %86 = vset.pattern.permute.xlu0 3
    %87 = vperm.xlu0 %86, %v57
    %v88 = vpop.permute.xlu0 %87
    %v90 = vperm.slane %v56, 3
    %v91 = vmul.f32 %v88, %v90
    %v92 = vadd.f32 %v85, %v91
    %vm93 = vcmask 23552
    %94 = vst.msk [vmem:[#allocation8] sm:$0xff] %vm93, %v92
    // Predicated region
    $region26: #{_forward_impl.1} parent=1 // pred_check
      _
    $region27: #{_forward_impl.1} parent=1 // pred_check_branch
      %96 = sbr.rel (0) target = $region29
    $region28: #{_forward_impl.1} parent=1 // pred_region
      %98 = vsyncadd [#allocation4], 0
      %s100 = sshll.u32 [#allocation8], 4
      %s101 = int_to_ptr.vmem [resolvable:$true] %s100
      %s102 = sshll.u32 %s3, 4
      %s103 = int_to_ptr.hbm [resolvable:$true] %s102
      %105 = dma.vmem_to_hbm [thread:$0]  %s101, 128, %s103, [#allocation4]
    $region29: #{_forward_impl.1} parent=1 // pred_fallthru
      _
    // Predicated region
    $region30: #{_forward_impl.1} parent=1 // pred_check
      _
    $region31: #{_forward_impl.1} parent=1 // pred_check_branch
      %107 = sbr.rel (0) target = $region33
    $region32: #{_forward_impl.1} parent=1 // pred_region
      %109 = dma.done [#allocation4], 128
    $region33: #{_forward_impl.1} parent=1 // pred_fallthru
      _
    %110 = vsyncpa [#allocation3], 1
    %111 = vsyncpa [#allocation6], 1
    %112 = vsyncpa [#allocation4], 1

</llo_original>
